<compile_context>
chip_gen: v5e
topology: v5e:2x2
jax: 0.10.0
libtpu: 0.0.40
codegen_flags: <defaults>
</compile_context>

<pallas_src>
import functools

import jax
import jax.numpy as jnp
from jax.experimental import pallas as pl
from jax.experimental.pallas import tpu as pltpu

_NEG_LARGE = -1e30   # bias for padded logit lanes -> exp underflows to exactly 0
_LANE = 128
_SUBLANE = 8


def _round_up(x, m):
    return ((x + m - 1) // m) * m


def _mlp_policy_kernel(*refs, num_layers, compute_dtype):
    """refs = (x_ref, w0, b0, w1, b1, ..., w_{L-1}, b_{L-1}, out_ref).

    x_ref:   (TB, input_dim)       compute_dtype (bf16)
    w_i:     (d_in, d_out)         compute_dtype; last layer padded to 128 cols
    b_i:     (1, d_out)            f32; last layer padded with -1e30
    out_ref: (TB, act_num)         f32 (unpadded lane width)
    """
    x_ref = refs[0]
    out_ref = refs[-1]
    p = refs[1:-1]

    h = x_ref[...]                                  # already compute_dtype
    for layer in range(num_layers):
        w = p[2 * layer][...]
        b = p[2 * layer + 1][...]
        if h.dtype != w.dtype:
            h = h.astype(compute_dtype)             # no-op for layer 0
        h = jnp.dot(h, w, preferred_element_type=jnp.float32) + b
        if layer < num_layers - 1:
            h = jnp.maximum(h, 0.0)

    # h: (TB, act_padded) logits; padded lanes carry -1e30 bias -> exp == 0,
    # so the softmax over the padded buffer equals softmax over the real
    # act_num logits.  Exact division so rows sum to 1 (policy probabilities).
    m = jnp.max(h, axis=-1, keepdims=True)
    e = jnp.exp(h - m)
    denom = jnp.sum(e, axis=-1, keepdims=True)
    probs = e / denom

    act_num = out_ref.shape[-1]
    out_ref[...] = probs[:, :act_num].astype(out_ref.dtype)


def simple_mlp_policy_forward(x, params, *, compute_dtype=jnp.bfloat16,
                              batch_tile=1024):
    """x: (batch, input_dim) f32.  params: list of (W_t, b), W_t (in, out), b (1, out)."""
    num_layers = len(params)
    batch, input_dim = x.shape
    act_num = params[-1][0].shape[1]
    act_padded = _round_up(act_num, _LANE)

    # bf16 input: layer 0 consumes bf16 anyway, halves the input DMA bytes.
    x = x.astype(compute_dtype)

    # Sublane tile granularity (16 rows for bf16 packing, 8 for f32).
    itemsize = jnp.dtype(compute_dtype).itemsize
    sub = _SUBLANE * max(1, 4 // itemsize)
    batch_tile = max(sub, (batch_tile // sub) * sub)

    if batch > sub:
        # Aim for >= 2 grid steps so dimension_semantics=("parallel",) can use
        # both v7x TensorCores, without exceeding batch_tile.
        half = -(-batch // 2)
        tb = max(sub, min(batch_tile, _round_up(half, sub)))
    else:
        tb = sub
    grid = (pl.cdiv(batch, tb),)   # ragged last block: OOB rows are discarded

    # Prepare parameters: bf16 weights, f32 biases; pad final layer's logits to
    # 128 lanes (zero weight cols, -1e30 bias) for lane-dense VMEM compute.
    flat_params = []
    for i, (w, b) in enumerate(params):
        if i == num_layers - 1:
            pad = act_padded - w.shape[1]
            w = jnp.pad(w, ((0, 0), (0, pad)))
            b = jnp.pad(b, ((0, 0), (0, pad)), constant_values=_NEG_LARGE)
        flat_params.append(w.astype(compute_dtype))
        flat_params.append(b.astype(jnp.float32))

    # x / out are tiled over batch; weights & biases stay VMEM-resident across
    # all grid steps (same block index every iteration).
    in_specs = [pl.BlockSpec((tb, input_dim), lambda i: (i, 0))]
    for fp in flat_params:
        in_specs.append(pl.BlockSpec(fp.shape, lambda i: (0, 0)))
    # Unpadded output lane width -> act_num*4 B/row of HBM writeback.
    out_specs = pl.BlockSpec((tb, act_num), lambda i: (i, 0))

    # Generation-aware scoped-VMEM budget: params (conservatively x2 in case
    # Mosaic double-buffers the constant-index blocks) + double-buffered
    # activation/output tiles + headroom, capped at 7/8 of physical VMEM.
    param_bytes = sum(int(fp.size) * fp.dtype.itemsize for fp in flat_params)
    io_bytes = tb * input_dim * itemsize + tb * act_num * 4
    budget = 2 * param_bytes + 2 * io_bytes + (8 << 20)
    try:
        physical_vmem = int(getattr(pltpu.get_tpu_info(),
                                    "vmem_capacity_bytes", 64 << 20))
    except Exception:
        physical_vmem = 64 << 20        # v7x has the smallest VMEM
    vmem_cap = (physical_vmem * 7) // 8
    vmem_limit = int(min(max(budget, 32 << 20), vmem_cap))

    kernel = functools.partial(_mlp_policy_kernel,
                               num_layers=num_layers,
                               compute_dtype=compute_dtype)

    out = pl.pallas_call(
        kernel,
        out_shape=jax.ShapeDtypeStruct((batch, act_num), jnp.float32),
        grid=grid,
        in_specs=in_specs,
        out_specs=out_specs,
        compiler_params=pltpu.CompilerParams(
            dimension_semantics=("parallel",),
            vmem_limit_bytes=vmem_limit),
    )(x, *flat_params)

    return out


def init_params(key, input_dim, hidden_size, hidden_layer, act_num):
    """Deterministic synthetic parameters shaped like the PyTorch module.

    MLPNetwork(input_dim, output_dim=act_num, hidden_dim=hidden_size, hidden_layer):
      Linear(input_dim, hidden_size), ReLU,
      (hidden_layer - 1) x [Linear(hidden_size, hidden_size), ReLU],
      Linear(hidden_size, act_num)
    Weights returned already transposed to (in, out); biases as (1, out).
    """
    dims = [input_dim] + [hidden_size] * hidden_layer + [act_num]
    params = []
    for i in range(len(dims) - 1):
        key, wk, bk = jax.random.split(key, 3)
        fan_in = dims[i]
        bound = 1.0 / jnp.sqrt(fan_in)
        w = jax.random.uniform(wk, (dims[i], dims[i + 1]), jnp.float32, -bound, bound)
        b = jax.random.uniform(bk, (1, dims[i + 1]), jnp.float32, -bound, bound)
        params.append((w, b))
    return params


def reference_forward_f32(x, params):
    """Full-f32 reference (matches the PyTorch module exactly)."""
    h = x
    for w, b in params[:-1]:
        h = jnp.maximum(h @ w + b, 0.0)
    w, b = params[-1]
    logits = h @ w + b
    return jax.nn.softmax(logits, axis=-1)


def reference_forward_matched(x, params, compute_dtype):
    """Reference using the same mixed precision as the kernel (bf16 matmul, f32 acc)."""
    h = x
    for i, (w, b) in enumerate(params):
        y = jnp.dot(h.astype(compute_dtype), w.astype(compute_dtype),
                    preferred_element_type=jnp.float32) + b
        h = jnp.maximum(y, 0.0) if i < len(params) - 1 else y
    return jax.nn.softmax(h, axis=-1)


if __name__ == "__main__":
    # Small shapes consistent with the module's forward.
    batch = 2
    input_dim = 32
    hidden_size = 32
    hidden_layer = 2
    act_num = 4

    key = jax.random.PRNGKey(0)
    key, xk = jax.random.split(key)
    x = jax.random.normal(xk, (batch, input_dim), jnp.float32)
    params = init_params(key, input_dim, hidden_size, hidden_layer, act_num)

    probs = jax.block_until_ready(simple_mlp_policy_forward(x, params))

    ref_f32 = reference_forward_f32(x, params)
    ref_matched = reference_forward_matched(x, params, jnp.bfloat16)

    assert probs.shape == (batch, act_num)
    # Matches a reference with the same mixed precision.
    assert jnp.allclose(probs, ref_matched, atol=2e-3, rtol=2e-3)
    # Close to the full-f32 module semantics (bf16 weight quantization slack).
    assert jnp.allclose(probs, ref_f32, atol=2e-2, rtol=2e-2)
    # Exact division -> rows sum to 1 to f32 precision.
    assert jnp.allclose(jnp.sum(probs, axis=-1), 1.0, atol=1e-3)

    # Exercise the multi-step, ragged-boundary batch grid (parallel axis).
    key, xk2 = jax.random.split(key)
    xb = jax.random.normal(xk2, (300, input_dim), jnp.float32)
    probs_b = jax.block_until_ready(
        simple_mlp_policy_forward(xb, params, batch_tile=128))
    ref_b = reference_forward_matched(xb, params, jnp.bfloat16)
    assert probs_b.shape == (300, act_num)
    assert jnp.allclose(probs_b, ref_b, atol=2e-3, rtol=2e-3)
    assert jnp.allclose(jnp.sum(probs_b, axis=-1), 1.0, atol=1e-3)

    print("KERNEL_OK")
</pallas_src>

<mosaic_0001>
module attributes {stable_mosaic.version = 11 : i64} {
  func.func @_mlp_policy_kernel(%arg0: i32, %arg1: memref<16x32xbf16, #tpu.memory_space<vmem>>, %arg2: memref<32x32xbf16, #tpu.memory_space<vmem>>, %arg3: memref<1x32xf32, #tpu.memory_space<vmem>>, %arg4: memref<32x32xbf16, #tpu.memory_space<vmem>>, %arg5: memref<1x32xf32, #tpu.memory_space<vmem>>, %arg6: memref<32x128xbf16, #tpu.memory_space<vmem>>, %arg7: memref<1x128xf32, #tpu.memory_space<vmem>>, %arg8: memref<16x4xf32, #tpu.memory_space<vmem>>) attributes {dimension_semantics = [#tpu.dimension_semantics<parallel>], iteration_bounds = array<i64: 1>, scalar_prefetch = 0 : i64, scratch_operands = 0 : i64, tpu.core_type = #tpu.core_type<tc>, window_params = [{transform_indices = @transform_0, window_bounds = array<i64: 16, 32>}, {pipeline_mode = #tpu.pipeline_mode<synchronous>, transform_indices = @transform_1, window_bounds = array<i64: 32, 32>}, {pipeline_mode = #tpu.pipeline_mode<synchronous>, transform_indices = @transform_2, window_bounds = array<i64: 1, 32>}, {pipeline_mode = #tpu.pipeline_mode<synchronous>, transform_indices = @transform_3, window_bounds = array<i64: 32, 32>}, {pipeline_mode = #tpu.pipeline_mode<synchronous>, transform_indices = @transform_4, window_bounds = array<i64: 1, 32>}, {pipeline_mode = #tpu.pipeline_mode<synchronous>, transform_indices = @transform_5, window_bounds = array<i64: 32, 128>}, {pipeline_mode = #tpu.pipeline_mode<synchronous>, transform_indices = @transform_6, window_bounds = array<i64: 1, 128>}, {transform_indices = @transform_7, window_bounds = array<i64: 16, 4>}]} {
    %c0 = arith.constant 0 : index
    %c0_0 = arith.constant 0 : index
    %0 = vector.load %arg1[%c0, %c0_0] : memref<16x32xbf16, #tpu.memory_space<vmem>>, vector<16x32xbf16>
    %c0_1 = arith.constant 0 : index
    %c0_2 = arith.constant 0 : index
    %1 = vector.load %arg2[%c0_1, %c0_2] : memref<32x32xbf16, #tpu.memory_space<vmem>>, vector<32x32xbf16>
    %c0_3 = arith.constant 0 : index
    %c0_4 = arith.constant 0 : index
    %2 = vector.load %arg3[%c0_3, %c0_4] : memref<1x32xf32, #tpu.memory_space<vmem>>, vector<1x32xf32>
    %cst = arith.constant dense<0.000000e+00> : vector<16x32xf32>
    %3 = tpu.matmul %0, %1, %cst {dimension_numbers = #tpu.dot_dimension_numbers<[1], [0], [0], [1], [0, 0, 1, 1], [], []>} : vector<16x32xbf16>, vector<32x32xbf16>, vector<16x32xf32> -> vector<16x32xf32>
    %4 = vector.broadcast %2 : vector<1x32xf32> to vector<16x32xf32>
    %5 = arith.addf %3, %4 : vector<16x32xf32>
    %cst_5 = arith.constant 0.000000e+00 : f32
    %6 = vector.broadcast %cst_5 : f32 to vector<16x32xf32>
    %7 = arith.maximumf %5, %6 : vector<16x32xf32>
    %c0_6 = arith.constant 0 : index
    %c0_7 = arith.constant 0 : index
    %8 = vector.load %arg4[%c0_6, %c0_7] : memref<32x32xbf16, #tpu.memory_space<vmem>>, vector<32x32xbf16>
    %c0_8 = arith.constant 0 : index
    %c0_9 = arith.constant 0 : index
    %9 = vector.load %arg5[%c0_8, %c0_9] : memref<1x32xf32, #tpu.memory_space<vmem>>, vector<1x32xf32>
    %10 = arith.truncf %7 : vector<16x32xf32> to vector<16x32xbf16>
    %cst_10 = arith.constant dense<0.000000e+00> : vector<16x32xf32>
    %11 = tpu.matmul %10, %8, %cst_10 {dimension_numbers = #tpu.dot_dimension_numbers<[1], [0], [0], [1], [0, 0, 1, 1], [], []>} : vector<16x32xbf16>, vector<32x32xbf16>, vector<16x32xf32> -> vector<16x32xf32>
    %12 = vector.broadcast %9 : vector<1x32xf32> to vector<16x32xf32>
    %13 = arith.addf %11, %12 : vector<16x32xf32>
    %cst_11 = arith.constant 0.000000e+00 : f32
    %14 = vector.broadcast %cst_11 : f32 to vector<16x32xf32>
    %15 = arith.maximumf %13, %14 : vector<16x32xf32>
    %c0_12 = arith.constant 0 : index
    %c0_13 = arith.constant 0 : index
    %16 = vector.load %arg6[%c0_12, %c0_13] : memref<32x128xbf16, #tpu.memory_space<vmem>>, vector<32x128xbf16>
    %c0_14 = arith.constant 0 : index
    %c0_15 = arith.constant 0 : index
    %17 = vector.load %arg7[%c0_14, %c0_15] : memref<1x128xf32, #tpu.memory_space<vmem>>, vector<1x128xf32>
    %18 = arith.truncf %15 : vector<16x32xf32> to vector<16x32xbf16>
    %cst_16 = arith.constant dense<0.000000e+00> : vector<16x128xf32>
    %19 = tpu.matmul %18, %16, %cst_16 {dimension_numbers = #tpu.dot_dimension_numbers<[1], [0], [0], [1], [0, 0, 1, 1], [], []>} : vector<16x32xbf16>, vector<32x128xbf16>, vector<16x128xf32> -> vector<16x128xf32>
    %20 = vector.broadcast %17 : vector<1x128xf32> to vector<16x128xf32>
    %21 = arith.addf %19, %20 : vector<16x128xf32>
    %cst_17 = arith.constant dense<0xFF800000> : vector<16xf32>
    %22 = vector.multi_reduction <maximumf>, %21, %cst_17 [1] : vector<16x128xf32> to vector<16xf32>
    %23 = vector.shape_cast %22 : vector<16xf32> to vector<16x1xf32>
    %24 = vector.broadcast %23 : vector<16x1xf32> to vector<16x128xf32>
    %25 = arith.subf %21, %24 : vector<16x128xf32>
    %26 = math.exp %25 : vector<16x128xf32>
    %cst_18 = arith.constant dense<0.000000e+00> : vector<16xf32>
    %27 = vector.multi_reduction <add>, %26, %cst_18 [1] : vector<16x128xf32> to vector<16xf32>
    %28 = vector.shape_cast %27 : vector<16xf32> to vector<16x1xf32>
    %29 = vector.broadcast %28 : vector<16x1xf32> to vector<16x128xf32>
    %30 = arith.divf %26, %29 : vector<16x128xf32>
    %31 = vector.extract_strided_slice %30 {offsets = [0, 0], sizes = [16, 4], strides = [1, 1]} : vector<16x128xf32> to vector<16x4xf32>
    %c0_19 = arith.constant 0 : index
    %c0_20 = arith.constant 0 : index
    %32 = vector.load %arg8[%c0_19, %c0_20] : memref<16x4xf32, #tpu.memory_space<vmem>>, vector<16x4xf32>
    tpu.vector_store %arg8[%c0_19, %c0_20], %31 {strides = array<i32>} : memref<16x4xf32, #tpu.memory_space<vmem>>, vector<16x4xf32>,
    return
  }
  func.func @transform_0(%arg0: i32) -> (i32, i32) {
    %c0_i32 = arith.constant 0 : i32
    %c0_i32_0 = arith.constant 0 : i32
    return %arg0, %c0_i32 : i32, i32
  }
  func.func @transform_1(%arg0: i32) -> (i32, i32) {
    %c0_i32 = arith.constant 0 : i32
    %c0_i32_0 = arith.constant 0 : i32
    %c0_i32_1 = arith.constant 0 : i32
    return %c0_i32, %c0_i32_0 : i32, i32
  }
  func.func @transform_2(%arg0: i32) -> (i32, i32) {
    %c0_i32 = arith.constant 0 : i32
    %c0_i32_0 = arith.constant 0 : i32
    %c0_i32_1 = arith.constant 0 : i32
    return %c0_i32, %c0_i32_0 : i32, i32
  }
  func.func @transform_3(%arg0: i32) -> (i32, i32) {
    %c0_i32 = arith.constant 0 : i32
    %c0_i32_0 = arith.constant 0 : i32
    %c0_i32_1 = arith.constant 0 : i32
    return %c0_i32, %c0_i32_0 : i32, i32
  }
  func.func @transform_4(%arg0: i32) -> (i32, i32) {
    %c0_i32 = arith.constant 0 : i32
    %c0_i32_0 = arith.constant 0 : i32
    %c0_i32_1 = arith.constant 0 : i32
    return %c0_i32, %c0_i32_0 : i32, i32
  }
  func.func @transform_5(%arg0: i32) -> (i32, i32) {
    %c0_i32 = arith.constant 0 : i32
    %c0_i32_0 = arith.constant 0 : i32
    %c0_i32_1 = arith.constant 0 : i32
    return %c0_i32, %c0_i32_0 : i32, i32
  }
  func.func @transform_6(%arg0: i32) -> (i32, i32) {
    %c0_i32 = arith.constant 0 : i32
    %c0_i32_0 = arith.constant 0 : i32
    %c0_i32_1 = arith.constant 0 : i32
    return %c0_i32, %c0_i32_0 : i32, i32
  }
  func.func @transform_7(%arg0: i32) -> (i32, i32) {
    %c0_i32 = arith.constant 0 : i32
    %c0_i32_0 = arith.constant 0 : i32
    return %arg0, %c0_i32 : i32, i32
  }
}

</mosaic_0001>

<llo_original>
// kernel: tpu_custom_call.1
$region0: #{tpu_custom_call.1}
  #allocation0 [shape = 'u32[]', space=smem, size = 0x4, offset = 0x4, fixed_abs, tag = 'smem constant byte address 0x4 - core index']
  #allocation1 [shape = 'u32[72,128]{1,0:T(1,128)}', space=vmem, size = 0x9000, scoped, tag = 'internal scratch']
  %s0 = inlined_call_operand.hbm [shape: bf16[2,32], index: 0, kind: input, shape index: {}]
  %s1 = inlined_call_operand.hbm [shape: bf16[32,32], index: 1, kind: input, shape index: {}]
  %s2 = inlined_call_operand.vmem [shape: f32[1,32], index: 2, kind: input, shape index: {}]
  %s3 = inlined_call_operand.hbm [shape: bf16[32,32], index: 3, kind: input, shape index: {}]
  %s4 = inlined_call_operand.vmem [shape: f32[1,32], index: 4, kind: input, shape index: {}]
  %s5 = inlined_call_operand.hbm [shape: bf16[32,128], index: 5, kind: input, shape index: {}]
  %s6 = inlined_call_operand.vmem [shape: f32[1,128], index: 6, kind: input, shape index: {}]
  %s7 = inlined_call_operand.hbm [shape: f32[2,4], index: 7, kind: output, shape index: {}]
  %s8 = sld [smem:[#allocation0]]
  $region54: #{tpu_custom_call.1} parent=0
    _
  %s10 = ssub.s32 1, %s8
  %s11 = scalar_select 0, %s10, %s8
  $region1: #{tpu_custom_call.1} parent=0
    #allocation2 [shape = 'u8[4096]{0}', space=vmem, size = 0x1000, scoped, tag = 'input window, operand 0, single buffered']
    #allocation3 [shape = 's32[1]{0}', space=sflag, size = 0x4, scoped, tag = 'scoped memory for tpu_custom_call.1']
    #allocation4 [shape = 's32[1]{0}', space=sflag, size = 0x4, scoped, tag = 'scoped memory for tpu_custom_call.1']
    #allocation5 [shape = 'u8[8192]{0}', space=vmem, size = 0x2000, scoped, tag = 'input window, operand 1, single buffered']
    #allocation6 [shape = 's32[1]{0}', space=sflag, size = 0x4, scoped, tag = 'scoped memory for tpu_custom_call.1']
    #allocation7 [shape = 'u8[8192]{0}', space=vmem, size = 0x2000, scoped, tag = 'input window, operand 3, single buffered']
    #allocation8 [shape = 'u8[8192]{0}', space=vmem, size = 0x2000, scoped, tag = 'input window, operand 5, single buffered']
    #allocation9 [shape = 's32[1]{0}', space=sflag, size = 0x4, scoped, tag = 'scoped memory for tpu_custom_call.1']
    #allocation10 [shape = 'u8[8192]{0}', space=vmem, size = 0x2000, scoped, tag = 'output window, operand 0, single buffered']
    %12 = vsyncpa [#allocation3], 0
    %13 = vsyncpa [#allocation6], 0
    %14 = vsyncpa [#allocation9], 0
    %15 = vsyncpa [#allocation4], 0
    // Predicated region
    $region2: #{tpu_custom_call.1} parent=1 // pred_check
      _
    $region3: #{tpu_custom_call.1} parent=1 // pred_check_branch
      %17 = sbr.rel (0) target = $region5
    $region4: #{tpu_custom_call.1} parent=1 // pred_region
      %19 = vsyncadd [#allocation3], 112
      %s20 = sshll.u32 %s0, 4
      %s21 = int_to_ptr.hbm [resolvable:$true] %s20
      %s22 = sshll.u32 [#allocation2], 4
      %s23 = int_to_ptr.vmem [resolvable:$true] %s22
      %28 = dma.hbm_to_vmem [thread:$0]  %s21, 16, %s23, [#allocation3], 16, 16, 1
    $region5: #{tpu_custom_call.1} parent=1 // pred_fallthru
      _
    // Predicated region
    $region6: #{tpu_custom_call.1} parent=1 // pred_check
      _
    $region7: #{tpu_custom_call.1} parent=1 // pred_check_branch
      %30 = sbr.rel (0) target = $region9
    $region8: #{tpu_custom_call.1} parent=1 // pred_region
      %32 = vsyncadd [#allocation6], 0
      %s33 = sshll.u32 %s1, 4
      %s34 = int_to_ptr.hbm [resolvable:$true] %s33
      %s35 = sshll.u32 [#allocation5], 4
      %s36 = int_to_ptr.vmem [resolvable:$true] %s35
      %41 = dma.hbm_to_vmem [thread:$0]  %s34, 256, %s36, [#allocation6], 64, 64, 4
    $region9: #{tpu_custom_call.1} parent=1 // pred_fallthru
      _
    // Predicated region
    $region10: #{tpu_custom_call.1} parent=1 // pred_check
      _
    $region11: #{tpu_custom_call.1} parent=1 // pred_check_branch
      %43 = sbr.rel (0) target = $region13
    $region12: #{tpu_custom_call.1} parent=1 // pred_region
      _
    $region13: #{tpu_custom_call.1} parent=1 // pred_fallthru
      _
    // Predicated region
    $region14: #{tpu_custom_call.1} parent=1 // pred_check
      _
    $region15: #{tpu_custom_call.1} parent=1 // pred_check_branch
      %45 = sbr.rel (0) target = $region17
    $region16: #{tpu_custom_call.1} parent=1 // pred_region
      %47 = vsyncadd [#allocation6], 0
      %s48 = sshll.u32 %s3, 4
      %s49 = int_to_ptr.hbm [resolvable:$true] %s48
      %s50 = sshll.u32 [#allocation7], 4
      %s51 = int_to_ptr.vmem [resolvable:$true] %s50
      %56 = dma.hbm_to_vmem [thread:$0]  %s49, 256, %s51, [#allocation6], 64, 64, 4
    $region17: #{tpu_custom_call.1} parent=1 // pred_fallthru
      _
    // Predicated region
    $region18: #{tpu_custom_call.1} parent=1 // pred_check
      _
    $region19: #{tpu_custom_call.1} parent=1 // pred_check_branch
      %58 = sbr.rel (0) target = $region21
    $region20: #{tpu_custom_call.1} parent=1 // pred_region
      _
    $region21: #{tpu_custom_call.1} parent=1 // pred_fallthru
      _
    // Predicated region
    $region22: #{tpu_custom_call.1} parent=1 // pred_check
      _
    $region23: #{tpu_custom_call.1} parent=1 // pred_check_branch
      %60 = sbr.rel (0) target = $region25
    $region24: #{tpu_custom_call.1} parent=1 // pred_region
      %62 = vsyncadd [#allocation9], 0
      %s63 = sshll.u32 %s5, 4
      %s64 = int_to_ptr.hbm [resolvable:$true] %s63
      %s65 = sshll.u32 [#allocation8], 4
      %s66 = int_to_ptr.vmem [resolvable:$true] %s65
      %71 = dma.hbm_to_vmem [thread:$0]  %s64, 256, %s66, [#allocation9], 64, 64, 4
    $region25: #{tpu_custom_call.1} parent=1 // pred_fallthru
      _
    // Predicated region
    $region26: #{tpu_custom_call.1} parent=1 // pred_check
      _
    $region27: #{tpu_custom_call.1} parent=1 // pred_check_branch
      %73 = sbr.rel (0) target = $region29
    $region28: #{tpu_custom_call.1} parent=1 // pred_region
      _
    $region29: #{tpu_custom_call.1} parent=1 // pred_fallthru
      _
    // Predicated region
    $region30: #{tpu_custom_call.1} parent=1 // pred_check
      _
    $region31: #{tpu_custom_call.1} parent=1 // pred_check_branch
      %75 = sbr.rel (0) target = $region33
    $region32: #{tpu_custom_call.1} parent=1 // pred_region
      %77 = dma.done [#allocation3], 128
    $region33: #{tpu_custom_call.1} parent=1 // pred_fallthru
      _
    // Predicated region
    $region34: #{tpu_custom_call.1} parent=1 // pred_check
      _
    $region35: #{tpu_custom_call.1} parent=1 // pred_check_branch
      %79 = sbr.rel (0) target = $region37
    $region36: #{tpu_custom_call.1} parent=1 // pred_region
      %81 = dma.done [#allocation6], 256
    $region37: #{tpu_custom_call.1} parent=1 // pred_fallthru
      _
    // Predicated region
    $region38: #{tpu_custom_call.1} parent=1 // pred_check
      _
    $region39: #{tpu_custom_call.1} parent=1 // pred_check_branch
      %83 = sbr.rel (0) target = $region41
    $region40: #{tpu_custom_call.1} parent=1 // pred_region
      %85 = dma.done [#allocation6], 256
    $region41: #{tpu_custom_call.1} parent=1 // pred_fallthru
      _
    // Predicated region
    $region42: #{tpu_custom_call.1} parent=1 // pred_check
      _
    $region43: #{tpu_custom_call.1} parent=1 // pred_check_branch
      %87 = sbr.rel (0) target = $region45
    $region44: #{tpu_custom_call.1} parent=1 // pred_region
      %89 = dma.done [#allocation9], 256
    $region45: #{tpu_custom_call.1} parent=1 // pred_fallthru
      _
    %v91 = vld [vmem:[#allocation2] sm:$0x1]
    %v92 = vld [vmem:[#allocation2 + $0x1] sm:$0x1]
    %v93 = vld [vmem:[#allocation2 + $0x2] sm:$0x1]
    %v94 = vld [vmem:[#allocation2 + $0x3] sm:$0x1]
    %v95 = vld [vmem:[#allocation2 + $0x4] sm:$0x1]
    %v96 = vld [vmem:[#allocation2 + $0x5] sm:$0x1]
    %v97 = vld [vmem:[#allocation2 + $0x6] sm:$0x1]
    %v98 = vld [vmem:[#allocation2 + $0x7] sm:$0x1]
    %v99 = vld [vmem:[#allocation5] sm:$0xf]
    %v100 = vld [vmem:[#allocation5 + $0x4] sm:$0xf]
    %v101 = vld [vmem:[#allocation5 + $0x8] sm:$0xf]
    %v102 = vld [vmem:[#allocation5 + $0xc] sm:$0xf]
    %v103 = vld [vmem:[%s2] sm:$0x1]
    %v105 = vperm.slane %v103, 0
    %108 = vst [vmem:[#allocation1] ss:$9 sm:$0xff] %v91
    %s110 = scalar_lea.vmem [#allocation1], 1
    %111 = vst [vmem:[%s110] ss:$9 sm:$0xff] %v92
    %s113 = scalar_lea.vmem [#allocation1], 2
    %114 = vst [vmem:[%s113] ss:$9 sm:$0xff] %v93
    %s116 = scalar_lea.vmem [#allocation1], 3
    %117 = vst [vmem:[%s116] ss:$9 sm:$0xff] %v94
    %s119 = scalar_lea.vmem [#allocation1], 4
    %120 = vst [vmem:[%s119] ss:$9 sm:$0xff] %v95
    %s122 = scalar_lea.vmem [#allocation1], 5
    %123 = vst [vmem:[%s122] ss:$9 sm:$0xff] %v96
    %s125 = scalar_lea.vmem [#allocation1], 6
    %126 = vst [vmem:[%s125] ss:$9 sm:$0xff] %v97
    %s128 = scalar_lea.vmem [#allocation1], 7
    %129 = vst [vmem:[%s128] ss:$9 sm:$0xff] %v98
    %v130 = vld [vmem:[#allocation1] sm:$0xff]
    %v135 = vunpack.c.l.b16 %v99
    %v136 = vunpack.c.l.b16 %v100
    %v137 = vunpack.c.l.b16 %v101
    %v138 = vunpack.c.l.b16 %v102
    %v139 = vpack.c.b16 %v136, %v135
    %v140 = vpack.c.b16 %v138, %v137
    %vm143 = vcmask 261120
    %v144 = vsel %vm143, %v130, 0
    %146 = vmatpush.bf16.msra.mxu0 0
    %147 = vmatpush.bf16.msra.mxu0 0
    %148 = vmatpush.bf16.msra.mxu0 0
    %149 = vmatpush.bf16.msra.mxu0 0
    %150 = vmatpush.bf16.msra.mxu0 0
    %151 = vmatpush.bf16.msra.mxu0 0
    %152 = vmatpush.bf16.msra.mxu0 %v140
    %153 = vmatpush.bf16.msra.mxu0 %v139
    %154 = vmatmul.bf16.gmra.mxu0 %v144
    %v155 = vpop.f32.mrf.mxu0
    %v156 = vadd.f32 %v105, %v155
    %v157 = vpop.f32.mrf.mxu0
    %v158 = vadd.f32 %v105, %v157
    %159 = vdwg.mxu0
    %v160 = vmax.f32 %v156, 0.0
    %v161 = vmax.f32 %v158, 0.0
    %v162 = vld [vmem:[#allocation7] sm:$0xf]
    %v163 = vld [vmem:[#allocation7 + $0x4] sm:$0xf]
    %v164 = vld [vmem:[#allocation7 + $0x8] sm:$0xf]
    %v165 = vld [vmem:[#allocation7 + $0xc] sm:$0xf]
    %v166 = vld [vmem:[%s4] sm:$0x1]
    %v167 = vpack.c.bf16 %v161, %v160
    %v169 = vperm.slane %v166, 0
    %v175 = vunpack.c.l.b16 %v162
    %v176 = vunpack.c.l.b16 %v163
    %v177 = vunpack.c.l.b16 %v164
    %v178 = vunpack.c.l.b16 %v165
    %v179 = vpack.c.b16 %v176, %v175
    %v180 = vpack.c.b16 %v178, %v177
    %v184 = vsel %vm143, %v167, 0
    %186 = vmatpush.bf16.msra.mxu0 0
    %187 = vmatpush.bf16.msra.mxu0 0
    %188 = vmatpush.bf16.msra.mxu0 0
    %189 = vmatpush.bf16.msra.mxu0 0
    %190 = vmatpush.bf16.msra.mxu0 0
    %191 = vmatpush.bf16.msra.mxu0 0
    %192 = vmatpush.bf16.msra.mxu0 %v180
    %193 = vmatpush.bf16.msra.mxu0 %v179
    %194 = vmatmul.bf16.gmra.mxu0 %v184
    %v195 = vpop.f32.mrf.mxu0
    %v196 = vadd.f32 %v169, %v195
    %v197 = vpop.f32.mrf.mxu0
    %v198 = vadd.f32 %v169, %v197
    %199 = vdwg.mxu0
    %v200 = vmax.f32 %v196, 0.0
    %v201 = vmax.f32 %v198, 0.0
    %v202 = vld [vmem:[#allocation8] sm:$0xf]
    %v203 = vld [vmem:[#allocation8 + $0x4] sm:$0xf]
    %v204 = vld [vmem:[#allocation8 + $0x8] sm:$0xf]
    %v205 = vld [vmem:[#allocation8 + $0xc] sm:$0xf]
    %v206 = vld [vmem:[%s6] sm:$0x1]
    %v207 = vpack.c.bf16 %v201, %v200
    %v209 = vperm.slane %v206, 0
    %v215 = vunpack.c.l.b16 %v202
    %v216 = vunpack.c.l.b16 %v203
    %v217 = vunpack.c.l.b16 %v204
    %v218 = vunpack.c.l.b16 %v205
    %v219 = vpack.c.b16 %v216, %v215
    %v220 = vpack.c.b16 %v218, %v217
    %v224 = vsel %vm143, %v207, 0
    %226 = vmatpush.bf16.msra.mxu0 0
    %227 = vmatpush.bf16.msra.mxu0 0
    %228 = vmatpush.bf16.msra.mxu0 0
    %229 = vmatpush.bf16.msra.mxu0 0
    %230 = vmatpush.bf16.msra.mxu0 0
    %231 = vmatpush.bf16.msra.mxu0 0
    %232 = vmatpush.bf16.msra.mxu0 %v220
    %233 = vmatpush.bf16.msra.mxu0 %v219
    %234 = vmatmul.bf16.gmra.mxu0 %v224
    %v235 = vpop.f32.mrf.mxu0
    %v236 = vadd.f32 %v209, %v235
    %v237 = vpop.f32.mrf.mxu0
    %v238 = vadd.f32 %v209, %v237
    %239 = vdwg.mxu0
    %240 = vmax.xlane.f32.xlu0 %v236
    %v241 = vpop.xlane.xlu0 %240
    %242 = vmax.xlane.f32.xlu0 %v238
    %v243 = vpop.xlane.xlu0 %242
    %v244 = vsub.f32 %v236, %v241
    %v245 = vsub.f32 %v238, %v243
    %v246 = vmul.f32 %v244, 1.442695
    %v247 = vpow.pop %v246
    %v248 = vmul.f32 %v245, 1.442695
    %v249 = vpow.pop %v248
    %250 = vadd.xlane.f32.xlu0 %v247
    %v251 = vpop.xlane.xlu0 %250
    %252 = vadd.xlane.f32.xlu0 %v249
    %v253 = vpop.xlane.xlu0 %252
    %v254 = vrcp.pop %v251
    %v255 = vmul.f32 %v251, %v254
    %v256 = vsub.f32 1.0, %v255
    %v257 = vmul.f32 %v254, %v256
    %v258 = vadd.f32 %v254, %v257
    %vm259 = vweird.f32 %v251
    %vm260 = vweird.f32 %v254
    %vm261 = vmor %vm259, %vm260
    %v262 = vsel %vm261, %v254, %v258
    %v263 = vand.u32 2147483647, %v251
    %vm264 = vcmp.eq.f32.partialorder %v263, 8.507059e+37
    %v265 = vand.u32 %v251, 2147483648
    %v266 = vor.u32 1.1754944e-38, %v265
    %v267 = vsel %vm264, %v266, %v262
    %v268 = vmul.f32 %v247, %v267
    %v269 = vrcp.pop %v253
    %v270 = vmul.f32 %v253, %v269
    %v271 = vsub.f32 1.0, %v270
    %v272 = vmul.f32 %v269, %v271
    %v273 = vadd.f32 %v269, %v272
    %vm274 = vweird.f32 %v253
    %vm275 = vweird.f32 %v269
    %vm276 = vmor %vm274, %vm275
    %v277 = vsel %vm276, %v269, %v273
    %v278 = vand.u32 2147483647, %v253
    %vm279 = vcmp.eq.f32.partialorder %v278, 8.507059e+37
    %v280 = vand.u32 %v253, 2147483648
    %v281 = vor.u32 1.1754944e-38, %v280
    %v282 = vsel %vm279, %v281, %v277
    %v283 = vmul.f32 %v249, %v282
    %vm284 = vcmask 31744
    %285 = vst.msk [vmem:[#allocation10] sm:$0xff] %vm284, %v268
    %286 = vst.msk [vmem:[#allocation10 + $0x8] sm:$0xff] %vm284, %v283
    // Predicated region
    $region46: #{tpu_custom_call.1} parent=1 // pred_check
      _
    $region47: #{tpu_custom_call.1} parent=1 // pred_check_branch
      %288 = sbr.rel (0) target = $region49
    $region48: #{tpu_custom_call.1} parent=1 // pred_region
      %290 = vsyncadd [#allocation4], 224
      %s291 = sshll.u32 [#allocation10], 4
      %s292 = int_to_ptr.vmem [resolvable:$true] %s291
      %s293 = sshll.u32 %s7, 4
      %s294 = int_to_ptr.hbm [resolvable:$true] %s293
      %299 = dma.vmem_to_hbm [thread:$0]  %s292, 32, %s294, [#allocation4], 32, 32, 2
    $region49: #{tpu_custom_call.1} parent=1 // pred_fallthru
      _
    // Predicated region
    $region50: #{tpu_custom_call.1} parent=1 // pred_check
      _
    $region51: #{tpu_custom_call.1} parent=1 // pred_check_branch
      %301 = sbr.rel (0) target = $region53
    $region52: #{tpu_custom_call.1} parent=1 // pred_region
      %303 = dma.done [#allocation4], 256
    $region53: #{tpu_custom_call.1} parent=1 // pred_fallthru
      _
    %304 = vsyncpa [#allocation3], 1
    %305 = vsyncpa [#allocation6], 1
    %306 = vsyncpa [#allocation9], 1
    %307 = vsyncpa [#allocation4], 1

</llo_original>
